<compile_context>
chip_gen: v7x
topology: tpu7x:2x2x1
jax: 0.10.0
libtpu: 0.0.40
codegen_flags: <defaults>
</compile_context>

<pallas_src>
import functools

import jax
import jax.numpy as jnp
from jax import lax
from jax.experimental import pallas as pl
from jax.experimental.pallas import tpu as pltpu

NEG_INF = float("-inf")


def _round_up(a, b):
    return -(-a // b) * b


def _vq_kernel(x_ref, mask_ref, subword_ref, targets_ref, ent_ref,
               hard_cols_ref, prob_cols_ref, *, n_rows, mask_rows):
    tile_r, vp = x_ref.shape

    # mask prob_msk / lane-padding columns with -inf
    x = x_ref[...].astype(jnp.float32) + mask_ref[...]                 # (tile_r, vp)

    # ---- hard one-hot of per-row argmax (first occurrence) ----
    xmax = jnp.max(x, axis=-1, keepdims=True)                          # (tile_r, 1)
    col = lax.broadcasted_iota(jnp.int32, (tile_r, vp), 1)
    idx = jnp.min(jnp.where(x == xmax, col, vp), axis=-1, keepdims=True)  # (tile_r,1)
    hard = (col == idx).astype(jnp.float32)                            # (tile_r, vp)

    # ---- softmax statistics (no full-tile log, no full-tile divide) ----
    s = x - xmax
    e = jnp.exp(s)                                                     # masked cols -> 0
    denom = jnp.sum(e, axis=-1, keepdims=True)                         # (tile_r, 1)
    recip = pl.reciprocal(denom, approx=True)
    p = e * recip                                                      # softmax(x)

    # per-row entropy: H = log(denom) - sum(p * (x - xmax))
    es = jnp.where(e > 0.0, e * s, 0.0)                                # guard 0 * -inf
    ent = jnp.log(denom) - recip * jnp.sum(es, axis=-1, keepdims=True)  # (tile_r, 1)

    # exclude padded rows (only compiled in when R % tile_r != 0)
    if mask_rows:
        row0 = pl.program_id(0) * tile_r
        rid = row0 + lax.broadcasted_iota(jnp.int32, (tile_r, 1), 0)
        rv = (rid < n_rows).astype(jnp.float32)                        # (tile_r, 1)
        hard_contrib = hard * rv
        prob_contrib = p * rv
    else:
        hard_contrib = hard
        prob_contrib = p

    hard_cols = jnp.sum(hard_contrib, axis=0, keepdims=True)           # (1, vp)
    prob_cols = jnp.sum(prob_contrib, axis=0, keepdims=True)           # (1, vp)

    subword_ref[...] = hard.astype(subword_ref.dtype)
    targets_ref[...] = idx.astype(jnp.int32)
    ent_ref[...] = ent
    hard_cols_ref[...] = hard_cols.reshape(1, 1, vp)
    prob_cols_ref[...] = prob_cols.reshape(1, 1, vp)


def simple_vector_quantizer(x, prob_msk=(0, 2, 3), temp=0.1, ent_temp=0.01):
    """x: (B, T, V) float logits. Returns a dict mirroring the torch module."""
    B, T, V = x.shape
    R = B * T

    # lane-dense padding of the codebook dim
    Vp = _round_up(V, 128)

    # row tile: ~512 KiB f32 input tile (safe on v5e 16 MiB / v7x 32 MiB scoped VMEM
    # with double-buffered IO + live temps), multiple of 16 (bf16 native sublane tile)
    budget_rows = max(16, (512 * 1024) // (Vp * 4))
    tile_r = max(16, (min(512, budget_rows) // 16) * 16)
    r_req = _round_up(R, 16)
    if r_req < tile_r:
        tile_r = r_req
    R_pad = _round_up(R, tile_r)
    num_tiles = R_pad // tile_r

    x2 = x.reshape(R, V).astype(jnp.float32)
    x_pad = jnp.pad(x2, ((0, R_pad - R), (0, Vp - V)))

    mask = jnp.zeros((1, Vp), jnp.float32)
    if Vp > V:
        mask = mask.at[0, V:].set(NEG_INF)
    if len(prob_msk) > 0:
        mask = mask.at[0, jnp.asarray(list(prob_msk), dtype=jnp.int32)].set(NEG_INF)

    kernel = functools.partial(_vq_kernel, n_rows=R, mask_rows=(R_pad != R))

    out_shapes = (
        jax.ShapeDtypeStruct((R_pad, Vp), jnp.bfloat16),        # hard one-hot (exact 0/1)
        jax.ShapeDtypeStruct((R_pad, 1), jnp.int32),            # targets
        jax.ShapeDtypeStruct((R_pad, 1), jnp.float32),          # per-row entropy
        jax.ShapeDtypeStruct((num_tiles, 1, Vp), jnp.float32),  # per-tile hard col sums
        jax.ShapeDtypeStruct((num_tiles, 1, Vp), jnp.float32),  # per-tile softmax col sums
    )

    subword_p, targets_p, ent_p, hard_cols, prob_cols = pl.pallas_call(
        kernel,
        out_shape=out_shapes,
        grid=(num_tiles,),
        in_specs=[
            pl.BlockSpec((tile_r, Vp), lambda i: (i, 0)),
            pl.BlockSpec((1, Vp), lambda i: (0, 0)),
        ],
        out_specs=[
            pl.BlockSpec((tile_r, Vp), lambda i: (i, 0)),
            pl.BlockSpec((tile_r, 1), lambda i: (i, 0)),
            pl.BlockSpec((tile_r, 1), lambda i: (i, 0)),
            pl.BlockSpec((1, 1, Vp), lambda i: (i, 0, 0)),
            pl.BlockSpec((1, 1, Vp), lambda i: (i, 0, 0)),
        ],
        compiler_params=pltpu.CompilerParams(
            dimension_semantics=("parallel",)),
    )(x_pad, mask)

    # tiny cross-tile reductions in plain JAX (padded cols contribute exactly 0)
    hard_probs = jnp.sum(hard_cols, axis=(0, 1)) / R            # (Vp,)
    code_ppl = jnp.exp(-jnp.sum(hard_probs * jnp.log(hard_probs + 1e-7)))
    avg_probs = jnp.sum(prob_cols, axis=(0, 1)) / R             # (Vp,)
    prob_ppl = jnp.exp(-jnp.sum(avg_probs * jnp.log(avg_probs + 1e-7)))
    ent_per_t = jnp.mean(ent_p[:R, 0].reshape(B, T), axis=0)    # (T,)
    div_loss = ((V - prob_ppl) / V) / ent_temp

    # TODO(synk): feat_len per-sequence masking, training-time soft/Gumbel
    # straight-through path (gradient-only), and groundTruthPerplexity MSE branch
    # are not implemented; this covers the default eval forward path.
    result = {
        "num_vars": V,
        "code_perplexity": code_ppl,
        "prob_perplexity": prob_ppl,
        "diversity_loss": div_loss,
        "temp": float(temp),
        "ent_per_t": ent_per_t,
        "subword_prob": subword_p[:R, :V].astype(x.dtype).reshape(B, T, V),
        "targets": targets_p[:R, 0].reshape(B, T, 1),
    }
    return result


if __name__ == "__main__":
    key = jax.random.PRNGKey(0)
    B, T, V = 2, 8, 32
    x = jax.random.normal(key, (B, T, V), dtype=jnp.float32)

    result = simple_vector_quantizer(x)
    jax.block_until_ready(result["subword_prob"])
    jax.block_until_ready(result["targets"])
    jax.block_until_ready(result["ent_per_t"])
    jax.block_until_ready(result["prob_perplexity"])
    jax.block_until_ready(result["code_perplexity"])
    print("KERNEL_OK")
</pallas_src>

<mosaic_0001>
module attributes {stable_mosaic.version = 11 : i64} {
  func.func @_vq_kernel(%arg0: i32, %arg1: memref<16x128xf32, #tpu.memory_space<vmem>>, %arg2: memref<1x128xf32, #tpu.memory_space<vmem>>, %arg3: memref<16x128xbf16, #tpu.memory_space<vmem>>, %arg4: memref<16x1xi32, #tpu.memory_space<vmem>>, %arg5: memref<16x1xf32, #tpu.memory_space<vmem>>, %arg6: memref<1x1x128xf32, #tpu.memory_space<vmem>>, %arg7: memref<1x1x128xf32, #tpu.memory_space<vmem>>) attributes {dimension_semantics = [#tpu.dimension_semantics<parallel>], iteration_bounds = array<i64: 1>, scalar_prefetch = 0 : i64, scratch_operands = 0 : i64, tpu.core_type = #tpu.core_type<tc>, window_params = [{transform_indices = @transform_0, window_bounds = array<i64: 16, 128>}, {pipeline_mode = #tpu.pipeline_mode<synchronous>, transform_indices = @transform_1, window_bounds = array<i64: 1, 128>}, {transform_indices = @transform_2, window_bounds = array<i64: 16, 128>}, {transform_indices = @transform_3, window_bounds = array<i64: 16, 1>}, {transform_indices = @transform_4, window_bounds = array<i64: 16, 1>}, {transform_indices = @transform_5, window_bounds = array<i64: 1, 1, 128>}, {transform_indices = @transform_6, window_bounds = array<i64: 1, 1, 128>}]} {
    %c0 = arith.constant 0 : index
    %c0_0 = arith.constant 0 : index
    %0 = vector.load %arg1[%c0, %c0_0] : memref<16x128xf32, #tpu.memory_space<vmem>>, vector<16x128xf32>
    %c0_1 = arith.constant 0 : index
    %c0_2 = arith.constant 0 : index
    %1 = vector.load %arg2[%c0_1, %c0_2] : memref<1x128xf32, #tpu.memory_space<vmem>>, vector<1x128xf32>
    %2 = vector.broadcast %1 : vector<1x128xf32> to vector<16x128xf32>
    %3 = arith.addf %0, %2 : vector<16x128xf32>
    %cst = arith.constant dense<0xFF800000> : vector<16xf32>
    %4 = vector.multi_reduction <maximumf>, %3, %cst [1] : vector<16x128xf32> to vector<16xf32>
    %5 = vector.shape_cast %4 : vector<16xf32> to vector<16x1xf32>
    %6 = tpu.iota {dimensions = array<i32: 1>} : vector<16x128xi32>
    %7 = vector.broadcast %5 : vector<16x1xf32> to vector<16x128xf32>
    %8 = arith.cmpf oeq, %3, %7 : vector<16x128xf32>
    %c128_i32 = arith.constant 128 : i32
    %9 = vector.broadcast %c128_i32 : i32 to vector<16x128xi32>
    %10 = arith.select %8, %6, %9 : vector<16x128xi1>, vector<16x128xi32>
    %cst_3 = arith.constant dense<2147483647> : vector<16xi32>
    %11 = vector.multi_reduction <minsi>, %10, %cst_3 [1] : vector<16x128xi32> to vector<16xi32>
    %12 = vector.shape_cast %11 : vector<16xi32> to vector<16x1xi32>
    %13 = vector.broadcast %12 : vector<16x1xi32> to vector<16x128xi32>
    %14 = arith.cmpi eq, %6, %13 : vector<16x128xi32>
    %15 = arith.extui %14 : vector<16x128xi1> to vector<16x128xi32>
    %16 = arith.sitofp %15 : vector<16x128xi32> to vector<16x128xf32>
    %17 = vector.broadcast %5 : vector<16x1xf32> to vector<16x128xf32>
    %18 = arith.subf %3, %17 : vector<16x128xf32>
    %19 = math.exp %18 : vector<16x128xf32>
    %cst_4 = arith.constant dense<0.000000e+00> : vector<16xf32>
    %20 = vector.multi_reduction <add>, %19, %cst_4 [1] : vector<16x128xf32> to vector<16xf32>
    %21 = vector.shape_cast %20 : vector<16xf32> to vector<16x1xf32>
    %22 = tpu.reciprocal %21 {approx = true} : vector<16x1xf32> -> vector<16x1xf32>
    %23 = vector.broadcast %22 : vector<16x1xf32> to vector<16x128xf32>
    %24 = arith.mulf %19, %23 : vector<16x128xf32>
    %cst_5 = arith.constant 0.000000e+00 : f32
    %25 = vector.broadcast %cst_5 : f32 to vector<16x128xf32>
    %26 = arith.cmpf ogt, %19, %25 : vector<16x128xf32>
    %27 = arith.mulf %19, %18 : vector<16x128xf32>
    %cst_6 = arith.constant 0.000000e+00 : f32
    %28 = vector.broadcast %cst_6 : f32 to vector<16x128xf32>
    %29 = arith.select %26, %27, %28 : vector<16x128xi1>, vector<16x128xf32>
    %30 = math.log %21 : vector<16x1xf32>
    %cst_7 = arith.constant dense<0.000000e+00> : vector<16xf32>
    %31 = vector.multi_reduction <add>, %29, %cst_7 [1] : vector<16x128xf32> to vector<16xf32>
    %32 = vector.shape_cast %31 : vector<16xf32> to vector<16x1xf32>
    %33 = arith.mulf %22, %32 : vector<16x1xf32>
    %34 = arith.subf %30, %33 : vector<16x1xf32>
    %cst_8 = arith.constant dense<0.000000e+00> : vector<128xf32>
    %35 = vector.multi_reduction <add>, %16, %cst_8 [0] : vector<16x128xf32> to vector<128xf32>
    %36 = vector.shape_cast %35 : vector<128xf32> to vector<1x128xf32>
    %cst_9 = arith.constant dense<0.000000e+00> : vector<128xf32>
    %37 = vector.multi_reduction <add>, %24, %cst_9 [0] : vector<16x128xf32> to vector<128xf32>
    %38 = vector.shape_cast %37 : vector<128xf32> to vector<1x128xf32>
    %39 = arith.truncf %16 : vector<16x128xf32> to vector<16x128xbf16>
    %c0_10 = arith.constant 0 : index
    %c0_11 = arith.constant 0 : index
    %40 = vector.load %arg3[%c0_10, %c0_11] : memref<16x128xbf16, #tpu.memory_space<vmem>>, vector<16x128xbf16>
    tpu.vector_store %arg3[%c0_10, %c0_11], %39 {strides = array<i32>} : memref<16x128xbf16, #tpu.memory_space<vmem>>, vector<16x128xbf16>,
    %c0_12 = arith.constant 0 : index
    %c0_13 = arith.constant 0 : index
    %41 = vector.load %arg4[%c0_12, %c0_13] : memref<16x1xi32, #tpu.memory_space<vmem>>, vector<16x1xi32>
    tpu.vector_store %arg4[%c0_12, %c0_13], %12 {strides = array<i32>} : memref<16x1xi32, #tpu.memory_space<vmem>>, vector<16x1xi32>,
    %c0_14 = arith.constant 0 : index
    %c0_15 = arith.constant 0 : index
    %42 = vector.load %arg5[%c0_14, %c0_15] : memref<16x1xf32, #tpu.memory_space<vmem>>, vector<16x1xf32>
    tpu.vector_store %arg5[%c0_14, %c0_15], %34 {strides = array<i32>} : memref<16x1xf32, #tpu.memory_space<vmem>>, vector<16x1xf32>,
    %43 = vector.shape_cast %36 : vector<1x128xf32> to vector<1x1x128xf32>
    %c0_16 = arith.constant 0 : index
    %c0_17 = arith.constant 0 : index
    %c0_18 = arith.constant 0 : index
    %44 = vector.load %arg6[%c0_16, %c0_17, %c0_18] : memref<1x1x128xf32, #tpu.memory_space<vmem>>, vector<1x1x128xf32>
    tpu.vector_store %arg6[%c0_16, %c0_17, %c0_18], %43 {strides = array<i32>} : memref<1x1x128xf32, #tpu.memory_space<vmem>>, vector<1x1x128xf32>,
    %45 = vector.shape_cast %38 : vector<1x128xf32> to vector<1x1x128xf32>
    %c0_19 = arith.constant 0 : index
    %c0_20 = arith.constant 0 : index
    %c0_21 = arith.constant 0 : index
    %46 = vector.load %arg7[%c0_19, %c0_20, %c0_21] : memref<1x1x128xf32, #tpu.memory_space<vmem>>, vector<1x1x128xf32>
    tpu.vector_store %arg7[%c0_19, %c0_20, %c0_21], %45 {strides = array<i32>} : memref<1x1x128xf32, #tpu.memory_space<vmem>>, vector<1x1x128xf32>,
    return
  }
  func.func @transform_0(%arg0: i32) -> (i32, i32) {
    %c0_i32 = arith.constant 0 : i32
    %c0_i32_0 = arith.constant 0 : i32
    return %arg0, %c0_i32 : i32, i32
  }
  func.func @transform_1(%arg0: i32) -> (i32, i32) {
    %c0_i32 = arith.constant 0 : i32
    %c0_i32_0 = arith.constant 0 : i32
    %c0_i32_1 = arith.constant 0 : i32
    return %c0_i32, %c0_i32_0 : i32, i32
  }
  func.func @transform_2(%arg0: i32) -> (i32, i32) {
    %c0_i32 = arith.constant 0 : i32
    %c0_i32_0 = arith.constant 0 : i32
    return %arg0, %c0_i32 : i32, i32
  }
  func.func @transform_3(%arg0: i32) -> (i32, i32) {
    %c0_i32 = arith.constant 0 : i32
    %c0_i32_0 = arith.constant 0 : i32
    return %arg0, %c0_i32 : i32, i32
  }
  func.func @transform_4(%arg0: i32) -> (i32, i32) {
    %c0_i32 = arith.constant 0 : i32
    %c0_i32_0 = arith.constant 0 : i32
    return %arg0, %c0_i32 : i32, i32
  }
  func.func @transform_5(%arg0: i32) -> (i32, i32, i32) {
    %c0_i32 = arith.constant 0 : i32
    %c0_i32_0 = arith.constant 0 : i32
    %c0_i32_1 = arith.constant 0 : i32
    return %arg0, %c0_i32, %c0_i32_0 : i32, i32, i32
  }
  func.func @transform_6(%arg0: i32) -> (i32, i32, i32) {
    %c0_i32 = arith.constant 0 : i32
    %c0_i32_0 = arith.constant 0 : i32
    %c0_i32_1 = arith.constant 0 : i32
    return %arg0, %c0_i32, %c0_i32_0 : i32, i32, i32
  }
}

</mosaic_0001>

<llo_original>
// kernel: tpu_custom_call.1
$region0: #{tpu_custom_call.1}
  #allocation0 [shape = 'u32[]', space=smem, size = 0x4, offset = 0x4, fixed_abs, tag = 'smem constant byte address 0x4 - core index']
  #allocation1 [shape = 'u32[144,128]{1,0:T(1,128)}', space=vmem, size = 0x12000, scoped, tag = 'internal scratch']
  %s0 = inlined_call_operand.hbm [shape: f32[16,128], index: 0, kind: input, shape index: {}]
  %s1 = inlined_call_operand.vmem [shape: f32[1,128], index: 1, kind: input, shape index: {}]
  %s2 = inlined_call_operand.hbm [shape: bf16[16,128], index: 2, kind: output, shape index: {0}]
  %s3 = inlined_call_operand.vmem [shape: s32[16,1], index: 3, kind: output, shape index: {1}]
  %s4 = inlined_call_operand.vmem [shape: f32[16,1], index: 4, kind: output, shape index: {2}]
  %s5 = inlined_call_operand.hbm [shape: f32[1,1,128], index: 5, kind: output, shape index: {3}]
  %s6 = inlined_call_operand.hbm [shape: f32[1,1,128], index: 6, kind: output, shape index: {4}]
  %7 = xla_tuple %s2, %s3, %s4, %s5, %s6
  %s8 = sld [smem:[#allocation0]]
  $region54: #{tpu_custom_call.1} parent=0
    _
  %s10 = ssub.s32 1, %s8
  %s11 = scalar_select 0, %s10, %s8
  $region1: #{tpu_custom_call.1} parent=0
    #allocation2 [shape = 'u8[8192]{0}', space=vmem, size = 0x2000, scoped, tag = 'input window, operand 0, single buffered']
    #allocation3 [shape = 's32[1]{0}', space=sflag, size = 0x4, scoped, tag = 'scoped memory for tpu_custom_call.1']
    #allocation4 [shape = 's32[1]{0}', space=sflag, size = 0x4, scoped, tag = 'scoped memory for tpu_custom_call.1']
    #allocation5 [shape = 'u8[4096]{0}', space=vmem, size = 0x1000, scoped, tag = 'output window, operand 0, single buffered']
    #allocation6 [shape = 'u8[512]{0}', space=vmem, size = 0x400, scoped, tag = 'output window, operand 3, single buffered']
    #allocation7 [shape = 's32[1]{0}', space=sflag, size = 0x4, scoped, tag = 'scoped memory for tpu_custom_call.1']
    #allocation8 [shape = 'u8[512]{0}', space=vmem, size = 0x400, scoped, tag = 'output window, operand 4, single buffered']
    %12 = vsyncpa [#allocation3], 0
    %13 = vsyncpa [#allocation4], 0
    %14 = vsyncpa [#allocation7], 0
    // Predicated region
    $region2: #{tpu_custom_call.1} parent=1 // pred_check
      _
    $region3: #{tpu_custom_call.1} parent=1 // pred_check_branch
      %16 = sbr.rel (0) target = $region5
    $region4: #{tpu_custom_call.1} parent=1 // pred_region
      %s18 = ssub.s32 256, 256
      %19 = vsyncadd [#allocation3], %s18
      %s20 = sshll.u32 [#allocation2], 4
      %s21 = int_to_ptr.vmem [resolvable:$true] %s20
      %26 = dma.hbm_to_vmem [thread:$0]  %s0, 256, %s21, [#allocation3], 128, 128, 8
    $region5: #{tpu_custom_call.1} parent=1 // pred_fallthru
      _
    // Predicated region
    $region6: #{tpu_custom_call.1} parent=1 // pred_check
      _
    $region7: #{tpu_custom_call.1} parent=1 // pred_check_branch
      %28 = sbr.rel (0) target = $region9
    $region8: #{tpu_custom_call.1} parent=1 // pred_region
      _
    $region9: #{tpu_custom_call.1} parent=1 // pred_fallthru
      _
    // Predicated region
    $region10: #{tpu_custom_call.1} parent=1 // pred_check
      _
    $region11: #{tpu_custom_call.1} parent=1 // pred_check_branch
      %30 = sbr.rel (0) target = $region13
    $region12: #{tpu_custom_call.1} parent=1 // pred_region
      %31 = dma.done [#allocation3], 256
    $region13: #{tpu_custom_call.1} parent=1 // pred_fallthru
      _
    %v32 = vld [vmem:[#allocation2] sm:$0xff]
    %v33 = vld [vmem:[#allocation2 + $0x8] sm:$0xff]
    %v34 = vld [vmem:[%s1] sm:$0x1]
    %v36 = vlaneseq
    %v37 = vshrl.u32 %v36, 7
    %v38 = vsub.s32 0, %v37
    %v39 = vrot.slane %v34, %v38
    %v41 = vadd.f32 %v32, %v39
    %v42 = vadd.f32 %v33, %v39
    %43 = vmax.xlane.f32.xlu0 %v41
    %v44 = vpop.xlane.xlu0 %43
    %45 = vmax.xlane.f32.xlu0 %v42
    %v46 = vpop.xlane.xlu0 %45
    %v47 = vlaneseq
    %v48 = vand.u32 %v47, 127
    %vm49 = vcmp.eq.f32.partialorder %v41, %v44
    %vm50 = vcmp.eq.f32.partialorder %v42, %v46
    %v51 = vsel %vm49, %v48, 128
    %v52 = vsel %vm50, %v48, 128
    %v53 = vand.u32 %v51, 65535
    %v54 = vshra.s32 %v51, 16
    %v55 = vcvt.s32.f32 %v53
    %v56 = vcvt.s32.f32 %v54
    %57 = vmin.xlane.f32.xlu0 %v56
    %v58 = vpop.xlane.xlu0 %57
    %vm59 = vcmp.eq.f32.partialorder %v56, %v58
    %v60 = vsel %vm59, %v55, inf
    %61 = vmin.xlane.f32.xlu0 %v60
    %v62 = vpop.xlane.xlu0 %61
    %v63 = vcvt.f32.s32 %v62
    %v64 = vcvt.f32.s32 %v58
    %v65 = vshll.u32 %v64, 16
    %v66 = vadd.s32 %v65, %v63
    %v67 = vand.u32 %v52, 65535
    %v68 = vshra.s32 %v52, 16
    %v69 = vcvt.s32.f32 %v67
    %v70 = vcvt.s32.f32 %v68
    %71 = vmin.xlane.f32.xlu0 %v70
    %v72 = vpop.xlane.xlu0 %71
    %vm73 = vcmp.eq.f32.partialorder %v70, %v72
    %v74 = vsel %vm73, %v69, inf
    %75 = vmin.xlane.f32.xlu0 %v74
    %v76 = vpop.xlane.xlu0 %75
    %v77 = vcvt.f32.s32 %v76
    %v78 = vcvt.f32.s32 %v72
    %v79 = vshll.u32 %v78, 16
    %v80 = vadd.s32 %v79, %v77
    %vm81 = vcmp.eq.s32.totalorder %v48, %v66
    %vm82 = vcmp.eq.s32.totalorder %v48, %v80
    %v83 = vsel %vm81, 1, 0
    %v84 = vsel %vm82, 1, 0
    %v85 = vcvt.s32.f32 %v83
    %v86 = vcvt.s32.f32 %v84
    %v87 = vsub.f32 %v41, %v44
    %v88 = vsub.f32 %v42, %v46
    %v89 = vmul.f32 %v87, 1.442695
    %v90 = vpow.pop %v89
    %v91 = vmul.f32 %v88, 1.442695
    %v92 = vpow.pop %v91
    %93 = vadd.xlane.f32.xlu0 %v90
    %v94 = vpop.xlane.xlu0 %93
    %95 = vadd.xlane.f32.xlu0 %v92
    %v96 = vpop.xlane.xlu0 %95
    %v97 = vrcp.pop %v94
    %v98 = vrcp.pop %v96
    %v99 = vmul.f32 %v90, %v97
    %v100 = vmul.f32 %v92, %v98
    %vm101 = vcmp.gt.f32.partialorder %v90, 0.0
    %vm102 = vcmp.gt.f32.partialorder %v92, 0.0
    %v103 = vmul.f32 %v90, %v87
    %v104 = vmul.f32 %v92, %v88
    %v105 = vsel %vm101, %v103, 0.0
    %v106 = vsel %vm102, %v104, 0.0
    %v107 = vlog2.pop %v94
    %v108 = vmul.f32 %v107, 0.6931472
    %v109 = vlog2.pop %v96
    %v110 = vmul.f32 %v109, 0.6931472
    %111 = vadd.xlane.f32.xlu0 %v105
    %v112 = vpop.xlane.xlu0 %111
    %113 = vadd.xlane.f32.xlu0 %v106
    %v114 = vpop.xlane.xlu0 %113
    %v115 = vmul.f32 %v97, %v112
    %v116 = vmul.f32 %v98, %v114
    %v117 = vsub.f32 %v108, %v115
    %v118 = vsub.f32 %v110, %v116
    %v119 = vadd.f32 %v85, %v86
    %v120 = vrot.slane %v119, 4
    %v121 = vadd.f32 %v119, %v120
    %v122 = vrot.slane %v121, 2
    %v123 = vadd.f32 %v121, %v122
    %v124 = vrot.slane %v123, 1
    %v125 = vadd.f32 %v123, %v124
    %v126 = vadd.f32 %v99, %v100
    %v127 = vrot.slane %v126, 4
    %v128 = vadd.f32 %v126, %v127
    %v129 = vrot.slane %v128, 2
    %v130 = vadd.f32 %v128, %v129
    %v131 = vrot.slane %v130, 1
    %v132 = vadd.f32 %v130, %v131
    %v133 = vpack.c.bf16 %v86, %v85
    %v135 = vunpack.c.l.b16 %v133
    %v136 = vunpack.c.h.b16 %v133
    %v137 = vpack.c.b16 %v135, %v135
    %v138 = vpack.c.b16 %v136, %v136
    %141 = vst [vmem:[#allocation5] sm:$0xf] %v137
    %142 = vst [vmem:[#allocation5 + $0x4] sm:$0xf] %v138
    %vm143 = vcmask 7168
    %144 = vst.msk [vmem:[%s3] sm:$0xff] %vm143, %v66
    %145 = vst.msk [vmem:[%s3 + $0x8] sm:$0xff] %vm143, %v80
    %146 = vst.msk [vmem:[%s4] sm:$0xff] %vm143, %v117
    %147 = vst.msk [vmem:[%s4 + $0x8] sm:$0xff] %vm143, %v118
    %148 = vst [vmem:[#allocation6] sm:$0x1] %v125
    %149 = vst [vmem:[#allocation8] sm:$0x1] %v132
    // Predicated region
    $region14: #{tpu_custom_call.1} parent=1 // pred_check
      _
    $region15: #{tpu_custom_call.1} parent=1 // pred_check_branch
      %151 = sbr.rel (0) target = $region17
    $region16: #{tpu_custom_call.1} parent=1 // pred_region
      %s153 = ssub.s32 128, 128
      %154 = vsyncadd [#allocation4], %s153
      %s155 = sshll.u32 [#allocation5], 4
      %s156 = int_to_ptr.vmem [resolvable:$true] %s155
      %161 = dma.vmem_to_hbm [thread:$0]  %s156, 128, %s2, [#allocation4], 64, 64, 4
    $region17: #{tpu_custom_call.1} parent=1 // pred_fallthru
      _
    // Predicated region
    $region18: #{tpu_custom_call.1} parent=1 // pred_check
      _
    $region19: #{tpu_custom_call.1} parent=1 // pred_check_branch
      %163 = sbr.rel (0) target = $region21
    $region20: #{tpu_custom_call.1} parent=1 // pred_region
      _
    $region21: #{tpu_custom_call.1} parent=1 // pred_fallthru
      _
    // Predicated region
    $region22: #{tpu_custom_call.1} parent=1 // pred_check
      _
    $region23: #{tpu_custom_call.1} parent=1 // pred_check_branch
      %165 = sbr.rel (0) target = $region25
    $region24: #{tpu_custom_call.1} parent=1 // pred_region
      _
    $region25: #{tpu_custom_call.1} parent=1 // pred_fallthru
      _
    // Predicated region
    $region26: #{tpu_custom_call.1} parent=1 // pred_check
      _
    $region27: #{tpu_custom_call.1} parent=1 // pred_check_branch
      %167 = sbr.rel (0) target = $region29
    $region28: #{tpu_custom_call.1} parent=1 // pred_region
      %s169 = ssub.s32 16, 16
      %170 = vsyncadd [#allocation7], %s169
      %s172 = sshll.u32 [#allocation6], 4
      %s173 = int_to_ptr.vmem [resolvable:$true] %s172
      %175 = dma.vmem_to_hbm [thread:$0]  %s173, 16, %s5, [#allocation7]
    $region29: #{tpu_custom_call.1} parent=1 // pred_fallthru
      _
    // Predicated region
    $region30: #{tpu_custom_call.1} parent=1 // pred_check
      _
    $region31: #{tpu_custom_call.1} parent=1 // pred_check_branch
      %177 = sbr.rel (0) target = $region33
    $region32: #{tpu_custom_call.1} parent=1 // pred_region
      %s179 = ssub.s32 16, 16
      %180 = vsyncadd [#allocation7], %s179
      %s182 = sshll.u32 [#allocation8], 4
      %s183 = int_to_ptr.vmem [resolvable:$true] %s182
      %185 = dma.vmem_to_hbm [thread:$0]  %s183, 16, %s6, [#allocation7]
    $region33: #{tpu_custom_call.1} parent=1 // pred_fallthru
      _
    // Predicated region
    $region34: #{tpu_custom_call.1} parent=1 // pred_check
      _
    $region35: #{tpu_custom_call.1} parent=1 // pred_check_branch
      %187 = sbr.rel (0) target = $region37
    $region36: #{tpu_custom_call.1} parent=1 // pred_region
      %188 = dma.done [#allocation4], 128
    $region37: #{tpu_custom_call.1} parent=1 // pred_fallthru
      _
    // Predicated region
    $region38: #{tpu_custom_call.1} parent=1 // pred_check
      _
    $region39: #{tpu_custom_call.1} parent=1 // pred_check_branch
      %190 = sbr.rel (0) target = $region41
    $region40: #{tpu_custom_call.1} parent=1 // pred_region
      _
    $region41: #{tpu_custom_call.1} parent=1 // pred_fallthru
      _
    // Predicated region
    $region42: #{tpu_custom_call.1} parent=1 // pred_check
      _
    $region43: #{tpu_custom_call.1} parent=1 // pred_check_branch
      %192 = sbr.rel (0) target = $region45
    $region44: #{tpu_custom_call.1} parent=1 // pred_region
      _
    $region45: #{tpu_custom_call.1} parent=1 // pred_fallthru
      _
    // Predicated region
    $region46: #{tpu_custom_call.1} parent=1 // pred_check
      _
    $region47: #{tpu_custom_call.1} parent=1 // pred_check_branch
      %194 = sbr.rel (0) target = $region49
    $region48: #{tpu_custom_call.1} parent=1 // pred_region
      %195 = dma.done [#allocation7], 16
    $region49: #{tpu_custom_call.1} parent=1 // pred_fallthru
      _
    // Predicated region
    $region50: #{tpu_custom_call.1} parent=1 // pred_check
      _
    $region51: #{tpu_custom_call.1} parent=1 // pred_check_branch
      %197 = sbr.rel (0) target = $region53
    $region52: #{tpu_custom_call.1} parent=1 // pred_region
      %198 = dma.done [#allocation7], 16
    $region53: #{tpu_custom_call.1} parent=1 // pred_fallthru
      _
    %199 = vsyncpa [#allocation3], 1
    %200 = vsyncpa [#allocation4], 1
    %201 = vsyncpa [#allocation7], 1

</llo_original>
